<compile_context>
chip_gen: v7x
topology: tpu7x:2x2x1
jax: 0.10.0
libtpu: 0.0.40
codegen_flags: <defaults>
</compile_context>

<pallas_src>
import math
import functools

import jax
import jax.numpy as jnp
from jax.experimental import pallas as pl
from jax.experimental.pallas import tpu as pltpu


# ----------------------------------------------------------------------------
# Parameter / buffer construction (plain-JAX glue, deterministic)
# ----------------------------------------------------------------------------
def make_pe_buffer(d_model: int, max_len: int = 200) -> jnp.ndarray:
    """Builds the sinusoidal table pe of shape (max_len, d_model), float32."""
    position = jnp.arange(max_len, dtype=jnp.float32)[:, None]            # (L, 1)
    div_term = jnp.exp(
        jnp.arange(0, d_model, 2, dtype=jnp.float32)
        * (-math.log(10000.0) / d_model)
    )                                                                      # (D/2,)
    ang = position * div_term                                              # (L, D/2)
    # interleave sin/cos: pe[:, 0::2] = sin, pe[:, 1::2] = cos
    pe = jnp.stack([jnp.sin(ang), jnp.cos(ang)], axis=-1).reshape(max_len, d_model)
    return pe.astype(jnp.float32)


# ----------------------------------------------------------------------------
# Pallas kernel: lane-dense elementwise scale + broadcast-add of pe
# ----------------------------------------------------------------------------
def _pos_enc_kernel(x_ref, pe_ref, o_ref, *, scale: float, rep: int, ts: int):
    # x_ref / o_ref: (ts, B*D)          lane-dense slab of sequence rows
    # pe_ref:        (S_pad, pe_width)  full (resident) pe slab, float32
    i = pl.program_id(0)
    start = pl.multiple_of(i * ts, ts)             # sublane-aligned dynamic start
    pe_blk = pe_ref[pl.ds(start, ts), :]           # (ts, pe_width), f32
    if rep > 1:
        pe_blk = jnp.tile(pe_blk, (1, rep))        # (ts, B*D) whole-vreg replication
    x = x_ref[...].astype(jnp.float32)
    o_ref[...] = (x * scale + pe_blk).astype(o_ref.dtype)


def positional_encoding_forward(x: jnp.ndarray, pe_buf: jnp.ndarray,
                                d_model: int, *, donate_x: bool = False) -> jnp.ndarray:
    """x: (S, B, D); pe_buf: (max_len, D) float32."""
    S, B, D = x.shape
    assert D == d_model

    # Reproduce the module exactly: slice pe by x.shape[1], broadcast over dim 0.
    seq_len = B
    bshape = jnp.broadcast_shapes((seq_len, 1, D), (S, B, D))  # raises if invalid
    if bshape != (S, B, D):
        raise ValueError(
            f"pe[:x.shape[1]] broadcast would change output shape: {bshape}")
    # Effective per-sequence-position pe rows, shape (S, D) (tiny: <= max_len * D).
    pe_rows = jnp.broadcast_to(pe_buf[:seq_len, :], (S, D))

    # Lane-dense view: (S, B, D) -> (S, B*D). Contiguous reshape (free at XLA level).
    BD = B * D
    xf = x.reshape(S, BD)
    itemsize = x.dtype.itemsize

    # Pre-tile pe to 128 lanes when possible so the in-kernel broadcast is
    # whole-vreg replication (no intra-vreg lane permutes, no extra vst traffic).
    lane_rep = 1
    if D < 128 and (128 % D == 0) and (B % (128 // D) == 0):
        lane_rep = 128 // D
    pe_width = D * lane_rep
    rep = BD // pe_width                           # in-kernel tile factor
    assert pe_width * rep == BD
    pe_lane = jnp.tile(pe_rows, (1, lane_rep)) if lane_rep > 1 else pe_rows

    # NOTE: the dense-vst win needs BD % 128 == 0 (with D=32 -> B % 4 == 0);
    # otherwise the output degrades to masked partial stores (still correct).

    # Block size: ~4 MiB of x per grid step (good knee on v6e, amortizes per-step
    # cost on v7x), rounded to the dtype's sublane packing (f32:8, bf16:16, int8:32).
    sub = {4: 8, 2: 16, 1: 32}.get(itemsize, 8)
    row_bytes = BD * itemsize
    target_bytes = 4 * 1024 * 1024
    ts = max(1, target_bytes // row_bytes)
    ts = max(sub, (ts // sub) * sub)
    # Keep at least 2 blocks when there is enough work, so a 2-TC chip (v7x) can
    # shard the "parallel" grid axis across cores.
    if S >= 2 * sub:
        half = ((pl.cdiv(S, 2) + sub - 1) // sub) * sub
        ts = min(ts, half)
    if ts >= S:
        ts = S                     # whole array in one block (single DMA in/out)
    nb = pl.cdiv(S, ts)

    # pe is resident (index_map constant -> DMA'd once). Pad it to nb*ts rows so
    # the kernel's dynamic slice on the last (partial) x block stays in bounds.
    S_pad = nb * ts
    pe_pad = jnp.pad(pe_lane, ((0, S_pad - S), (0, 0))) if S_pad > S else pe_lane

    # Scoped-VMEM budget: 2x double-buffered in + 2x out blocks + resident pe,
    # plus margin.  Set explicitly so v5e's 16 MiB default doesn't bite, and cap
    # below v7x's 64 MiB physical VMEM.
    block_bytes = ts * BD * itemsize
    vmem_need = 4 * block_bytes + S_pad * pe_width * 4 + (2 << 20)
    vmem_limit = int(min(max(vmem_need, 16 << 20), 48 << 20))

    kernel = functools.partial(_pos_enc_kernel,
                               scale=math.sqrt(d_model), rep=rep, ts=ts)

    out_flat = pl.pallas_call(
        kernel,
        out_shape=jax.ShapeDtypeStruct((S, BD), x.dtype),
        grid_spec=pltpu.PrefetchScalarGridSpec(
            num_scalar_prefetch=0,
            grid=(nb,),
            in_specs=[
                pl.BlockSpec((ts, BD), lambda i: (i, 0)),        # x slab (lane-dense)
                pl.BlockSpec((S_pad, pe_width), lambda i: (0, 0)),  # resident pe
            ],
            out_specs=pl.BlockSpec((ts, BD), lambda i: (i, 0)),
        ),
        compiler_params=pltpu.CompilerParams(
            # TODO(synk): verify in the lowered dump that "parallel" actually
            # shards the S-blocks across the 2 TensorCores on v7x; if not,
            # switch to pltpu.CORE_PARALLEL / pl.core_map on that generation.
            dimension_semantics=("parallel",),
            vmem_limit_bytes=vmem_limit,
        ),
        input_output_aliases=({0: 0} if donate_x else {}),
    )(xf, pe_pad)

    return out_flat.reshape(S, B, D)


# ----------------------------------------------------------------------------
# Demo / correctness check
# ----------------------------------------------------------------------------
if __name__ == "__main__":
    d_model = 32
    max_len = 200
    seq = 8
    batch = 8          # == seq so the module's pe[:x.size(1)] broadcast is valid

    key = jax.random.PRNGKey(0)
    x = jax.random.normal(key, (seq, batch, d_model), dtype=jnp.float32)

    pe_buf = make_pe_buffer(d_model, max_len)

    out = positional_encoding_forward(x, pe_buf, d_model)
    out = jax.block_until_ready(out)

    # reference (plain JAX), same semantics as the PyTorch forward
    ref = x * math.sqrt(d_model) + pe_buf[: x.shape[1]][:, None, :]
    assert out.shape == x.shape and out.dtype == x.dtype
    assert jnp.allclose(out, ref, atol=1e-5, rtol=1e-5)

    print("KERNEL_OK")
</pallas_src>

<mosaic_0001>
module attributes {stable_mosaic.version = 11 : i64} {
  func.func @_pos_enc_kernel(%arg0: i32, %arg1: memref<8x256xf32, #tpu.memory_space<vmem>>, %arg2: memref<8x128xf32, #tpu.memory_space<vmem>>, %arg3: memref<8x256xf32, #tpu.memory_space<vmem>>) attributes {dimension_semantics = [#tpu.dimension_semantics<parallel>], iteration_bounds = array<i64: 1>, scalar_prefetch = 0 : i64, scratch_operands = 0 : i64, tpu.core_type = #tpu.core_type<tc>, window_params = [{transform_indices = @transform_0, window_bounds = array<i64: 8, 256>}, {pipeline_mode = #tpu.pipeline_mode<synchronous>, transform_indices = @transform_1, window_bounds = array<i64: 8, 128>}, {transform_indices = @transform_2, window_bounds = array<i64: 8, 256>}]} {
    %c8_i32 = arith.constant 8 : i32
    %0 = arith.muli %arg0, %c8_i32 : i32
    %1 = tpu.assume_multiple %0, 8 : i32
    %2 = arith.index_cast %1 : i32 to index
    %c0 = arith.constant 0 : index
    %3 = vector.load %arg2[%2, %c0] : memref<8x128xf32, #tpu.memory_space<vmem>>, vector<8x128xf32>
    %4 = tpu.concatenate %3, %3 in 1 : vector<8x128xf32>, vector<8x128xf32> -> vector<8x256xf32>
    %c0_0 = arith.constant 0 : index
    %c0_1 = arith.constant 0 : index
    %5 = vector.load %arg1[%c0_0, %c0_1] : memref<8x256xf32, #tpu.memory_space<vmem>>, vector<8x256xf32>
    %cst = arith.constant 5.65685415 : f32
    %6 = vector.broadcast %cst : f32 to vector<8x256xf32>
    %7 = arith.mulf %5, %6 : vector<8x256xf32>
    %8 = arith.addf %7, %4 : vector<8x256xf32>
    %c0_2 = arith.constant 0 : index
    %c0_3 = arith.constant 0 : index
    %9 = vector.load %arg3[%c0_2, %c0_3] : memref<8x256xf32, #tpu.memory_space<vmem>>, vector<8x256xf32>
    tpu.vector_store %arg3[%c0_2, %c0_3], %8 {strides = array<i32>} : memref<8x256xf32, #tpu.memory_space<vmem>>, vector<8x256xf32>,
    return
  }
  func.func @transform_0(%arg0: i32) -> (i32, i32) {
    %c0_i32 = arith.constant 0 : i32
    %c0_i32_0 = arith.constant 0 : i32
    return %arg0, %c0_i32 : i32, i32
  }
  func.func @transform_1(%arg0: i32) -> (i32, i32) {
    %c0_i32 = arith.constant 0 : i32
    %c0_i32_0 = arith.constant 0 : i32
    %c0_i32_1 = arith.constant 0 : i32
    return %c0_i32, %c0_i32_0 : i32, i32
  }
  func.func @transform_2(%arg0: i32) -> (i32, i32) {
    %c0_i32 = arith.constant 0 : i32
    %c0_i32_0 = arith.constant 0 : i32
    return %arg0, %c0_i32 : i32, i32
  }
}

</mosaic_0001>

<llo_original>
// kernel: tpu_custom_call.1
$region0: #{tpu_custom_call.1}
  #allocation0 [shape = 'u32[]', space=smem, size = 0x4, offset = 0x4, fixed_abs, tag = 'smem constant byte address 0x4 - core index']
  #allocation1 [shape = 'u32[144,128]{1,0:T(1,128)}', space=vmem, size = 0x12000, scoped, tag = 'internal scratch']
  %s0 = inlined_call_operand.hbm [shape: f32[8,256], index: 0, kind: input, shape index: {}]
  %s1 = inlined_call_operand.hbm [shape: f32[8,128], index: 1, kind: input, shape index: {}]
  %s2 = inlined_call_operand.hbm [shape: f32[8,256], index: 2, kind: output, shape index: {}]
  %s3 = sld [smem:[#allocation0]]
  $region26: #{tpu_custom_call.1} parent=0
    _
  %s5 = ssub.s32 1, %s3
  %s6 = scalar_select 0, %s5, %s3
  $region1: #{tpu_custom_call.1} parent=0
    #allocation2 [shape = 'u8[8192]{0}', space=vmem, size = 0x2000, scoped, tag = 'input window, operand 0, single buffered']
    #allocation3 [shape = 's32[1]{0}', space=sflag, size = 0x4, scoped, tag = 'scoped memory for tpu_custom_call.1']
    #allocation4 [shape = 's32[1]{0}', space=sflag, size = 0x4, scoped, tag = 'scoped memory for tpu_custom_call.1']
    #allocation5 [shape = 'u8[4096]{0}', space=vmem, size = 0x1000, scoped, tag = 'input window, operand 1, single buffered']
    #allocation6 [shape = 's32[1]{0}', space=sflag, size = 0x4, scoped, tag = 'scoped memory for tpu_custom_call.1']
    #allocation7 [shape = 'u8[8192]{0}', space=vmem, size = 0x2000, scoped, tag = 'output window, operand 0, single buffered']
    %7 = vsyncpa [#allocation3], 0
    %8 = vsyncpa [#allocation6], 0
    %9 = vsyncpa [#allocation4], 0
    // Predicated region
    $region2: #{tpu_custom_call.1} parent=1 // pred_check
      _
    $region3: #{tpu_custom_call.1} parent=1 // pred_check_branch
      %11 = sbr.rel (0) target = $region5
    $region4: #{tpu_custom_call.1} parent=1 // pred_region
      %s13 = ssub.s32 256, 256
      %14 = vsyncadd [#allocation3], %s13
      %s16 = sshll.u32 [#allocation2], 4
      %s17 = int_to_ptr.vmem [resolvable:$true] %s16
      %19 = dma.hbm_to_vmem [thread:$0]  %s0, 256, %s17, [#allocation3]
    $region5: #{tpu_custom_call.1} parent=1 // pred_fallthru
      _
    // Predicated region
    $region6: #{tpu_custom_call.1} parent=1 // pred_check
      _
    $region7: #{tpu_custom_call.1} parent=1 // pred_check_branch
      %21 = sbr.rel (0) target = $region9
    $region8: #{tpu_custom_call.1} parent=1 // pred_region
      %s23 = ssub.s32 128, 128
      %24 = vsyncadd [#allocation6], %s23
      %s26 = sshll.u32 [#allocation5], 4
      %s27 = int_to_ptr.vmem [resolvable:$true] %s26
      %29 = dma.hbm_to_vmem [thread:$0]  %s1, 128, %s27, [#allocation6]
    $region9: #{tpu_custom_call.1} parent=1 // pred_fallthru
      _
    // Predicated region
    $region10: #{tpu_custom_call.1} parent=1 // pred_check
      _
    $region11: #{tpu_custom_call.1} parent=1 // pred_check_branch
      %31 = sbr.rel (0) target = $region13
    $region12: #{tpu_custom_call.1} parent=1 // pred_region
      %32 = dma.done [#allocation3], 256
    $region13: #{tpu_custom_call.1} parent=1 // pred_fallthru
      _
    // Predicated region
    $region14: #{tpu_custom_call.1} parent=1 // pred_check
      _
    $region15: #{tpu_custom_call.1} parent=1 // pred_check_branch
      %34 = sbr.rel (0) target = $region17
    $region16: #{tpu_custom_call.1} parent=1 // pred_region
      %35 = dma.done [#allocation6], 128
    $region17: #{tpu_custom_call.1} parent=1 // pred_fallthru
      _
    %s36 = smul.u32 0, 8
    %s37 = scalar_lea.vmem [#allocation5], %s36
    %v38 = vld [vmem:[%s37] sm:$0xff]
    %v39 = vld [vmem:[#allocation2] sm:$0xff]
    %v40 = vld [vmem:[#allocation2 + $0x8] sm:$0xff]
    %v41 = vmul.f32 %v39, 5.656854
    %v42 = vmul.f32 %v40, 5.656854
    %v43 = vadd.f32 %v41, %v38
    %v44 = vadd.f32 %v42, %v38
    %45 = vst [vmem:[#allocation7] sm:$0xff] %v43
    %46 = vst [vmem:[#allocation7 + $0x8] sm:$0xff] %v44
    // Predicated region
    $region18: #{tpu_custom_call.1} parent=1 // pred_check
      _
    $region19: #{tpu_custom_call.1} parent=1 // pred_check_branch
      %48 = sbr.rel (0) target = $region21
    $region20: #{tpu_custom_call.1} parent=1 // pred_region
      %s50 = ssub.s32 256, 256
      %51 = vsyncadd [#allocation4], %s50
      %s53 = sshll.u32 [#allocation7], 4
      %s54 = int_to_ptr.vmem [resolvable:$true] %s53
      %56 = dma.vmem_to_hbm [thread:$0]  %s54, 256, %s2, [#allocation4]
    $region21: #{tpu_custom_call.1} parent=1 // pred_fallthru
      _
    // Predicated region
    $region22: #{tpu_custom_call.1} parent=1 // pred_check
      _
    $region23: #{tpu_custom_call.1} parent=1 // pred_check_branch
      %58 = sbr.rel (0) target = $region25
    $region24: #{tpu_custom_call.1} parent=1 // pred_region
      %59 = dma.done [#allocation4], 256
    $region25: #{tpu_custom_call.1} parent=1 // pred_fallthru
      _
    %60 = vsyncpa [#allocation3], 1
    %61 = vsyncpa [#allocation6], 1
    %62 = vsyncpa [#allocation4], 1

</llo_original>
